<compile_context>
chip_gen: v6e
topology: v6e:2x2x1
jax: 0.10.0
libtpu: 0.0.40
codegen_flags: <defaults>
</compile_context>

<pallas_src>
import functools

import jax
import jax.numpy as jnp
from jax.experimental import pallas as pl
from jax.experimental.pallas import tpu as pltpu


def _round_up(n, m):
    return (n + m - 1) // m * m


def _choose_tile_b(batch, d):
    # ~4 MiB per x buffer -> with double buffering stays well inside the
    # scoped-VMEM default on every generation (16 MiB v5e, 32 MiB v6e/v7x).
    budget_rows = (4 * 1024 * 1024) // (d * 4)
    tile = max(8, (budget_rows // 8) * 8)
    tile = min(tile, 1024)                    # keep per-step DMA reasonable
    tile = min(tile, _round_up(batch, 8))     # never larger than padded batch
    return tile


def _predict_kernel(x_ref, w_ref, b_ref, o_ref):
    # z = sum(x * w, axis=-1) + b  (VPU multiply + XLU lane reduce; no MXU,
    # no weight transpose). w (1, D) broadcasts over the batch tile.
    x = x_ref[...]                                          # (TILE_B, D)
    w = w_ref[...]                                          # (1, D)
    z = jnp.sum(x * w, axis=-1, keepdims=True) + b_ref[0]   # (TILE_B, 1)
    o_ref[...] = jax.nn.sigmoid(z).astype(o_ref.dtype)


def _loss_kernel(x_ref, w_ref, b_ref, y_ref, o_ref, *, batch, tile_b):
    i = pl.program_id(0)

    @pl.when(i == 0)
    def _init():
        o_ref[...] = jnp.zeros_like(o_ref)

    x = x_ref[...]
    w = w_ref[...]
    z = jnp.sum(x * w, axis=-1, keepdims=True) + b_ref[0]
    y_pred = jax.nn.sigmoid(z)
    diff = y_pred - y_ref[...]
    # Mask rows past the true batch (padding) so the mean is exact.
    row = i * tile_b + jax.lax.broadcasted_iota(jnp.int32, (tile_b, 1), 0)
    sq = jnp.where(row < batch, diff * diff, jnp.float32(0.0))
    o_ref[...] += jnp.sum(sq, keepdims=True)                # (1, 1)

    @pl.when(i == pl.num_programs(0) - 1)
    def _finalize():
        o_ref[...] = o_ref[...] / jnp.float32(batch)


def torch_model_forward(x, w, b, y=None):
    """Pallas equivalent of TorchModel.forward.

    x: (B, D) f32, w: (1, D) f32 (nn.Linear weight layout), b: (1,) f32,
    y: optional (B, 1) f32 targets -> returns scalar MSE loss.
    """
    B, D = x.shape
    tile_b = _choose_tile_b(B, D)
    b_pad = _round_up(B, tile_b)
    num_tiles = b_pad // tile_b

    x = x.astype(jnp.float32)
    if b_pad != B:
        x = jnp.pad(x, ((0, b_pad - B), (0, 0)))
    w = w.astype(jnp.float32)
    b1 = b.reshape(1).astype(jnp.float32)

    x_spec = pl.BlockSpec((tile_b, D), lambda i: (i, 0))
    w_spec = pl.BlockSpec((1, D), lambda i: (0, 0))              # resident weight
    b_spec = pl.BlockSpec(memory_space=pltpu.MemorySpace.SMEM)   # scalar path

    if y is None:
        y_pred = pl.pallas_call(
            _predict_kernel,
            out_shape=jax.ShapeDtypeStruct((b_pad, 1), jnp.float32),
            grid=(num_tiles,),
            in_specs=[x_spec, w_spec, b_spec],
            out_specs=pl.BlockSpec((tile_b, 1), lambda i: (i, 0)),
            compiler_params=pltpu.CompilerParams(
                dimension_semantics=("parallel",)),
            cost_estimate=pl.CostEstimate(
                flops=2 * b_pad * D + 2 * b_pad,
                transcendentals=b_pad,
                bytes_accessed=4 * (b_pad * D + D + 1 + b_pad)),
        )(x, w, b1)
        return y_pred[:B]

    y_p = y.astype(jnp.float32)
    if b_pad != B:
        y_p = jnp.pad(y_p, ((0, b_pad - B), (0, 0)))

    loss = pl.pallas_call(
        functools.partial(_loss_kernel, batch=B, tile_b=tile_b),
        out_shape=jax.ShapeDtypeStruct((1, 1), jnp.float32),
        grid=(num_tiles,),
        in_specs=[x_spec, w_spec, b_spec,
                  pl.BlockSpec((tile_b, 1), lambda i: (i, 0))],
        out_specs=pl.BlockSpec((1, 1), lambda i: (0, 0)),        # resident accumulator
        compiler_params=pltpu.CompilerParams(
            dimension_semantics=("arbitrary",)),
        cost_estimate=pl.CostEstimate(
            flops=2 * b_pad * D + 5 * b_pad,
            transcendentals=b_pad,
            bytes_accessed=4 * (b_pad * D + D + 1 + 2 * b_pad + 1)),
    )(x, w, b1, y_p)
    return loss[0, 0]  # scalar, like F.mse_loss


if __name__ == "__main__":
    key = jax.random.PRNGKey(0)
    kx, kw, kb, ky = jax.random.split(key, 4)

    batch, input_size = 8, 32
    x = jax.random.normal(kx, (batch, input_size), dtype=jnp.float32)
    # Deterministic parameter init (synthetic, mimicking nn.Linear shapes).
    w = jax.random.normal(kw, (1, input_size), dtype=jnp.float32) * 0.1
    b = jax.random.normal(kb, (1,), dtype=jnp.float32) * 0.1
    y = jax.random.uniform(ky, (batch, 1), dtype=jnp.float32)

    # Inference path (y=None)
    y_pred = torch_model_forward(x, w, b)
    jax.block_until_ready(y_pred)

    # Training/loss path (y given)
    loss = torch_model_forward(x, w, b, y)
    jax.block_until_ready(loss)

    # Reference check in plain JAX.
    ref_pred = jax.nn.sigmoid(x @ w.T + b)
    ref_loss = jnp.mean((ref_pred - y) ** 2)
    assert jnp.allclose(y_pred, ref_pred, atol=1e-5), "prediction mismatch"
    assert jnp.allclose(loss, ref_loss, atol=1e-5), "loss mismatch"

    print("KERNEL_OK")
</pallas_src>

<mosaic_0001>
module attributes {stable_mosaic.version = 11 : i64} {
  func.func @_predict_kernel(%arg0: i32, %arg1: memref<8x32xf32, #tpu.memory_space<vmem>>, %arg2: memref<1x32xf32, #tpu.memory_space<vmem>>, %arg3: memref<1xf32, #tpu.memory_space<smem>>, %arg4: memref<8x1xf32, #tpu.memory_space<vmem>>) attributes {dimension_semantics = [#tpu.dimension_semantics<parallel>], iteration_bounds = array<i64: 1>, scalar_prefetch = 0 : i64, scratch_operands = 0 : i64, tpu.core_type = #tpu.core_type<tc>, window_params = [{transform_indices = @transform_0, window_bounds = array<i64: 8, 32>}, {pipeline_mode = #tpu.pipeline_mode<synchronous>, transform_indices = @transform_1, window_bounds = array<i64: 1, 32>}, {transform_indices = @transform_2, window_bounds = array<i64: 1>}, {transform_indices = @transform_3, window_bounds = array<i64: 8, 1>}]} {
    %c0 = arith.constant 0 : index
    %c0_0 = arith.constant 0 : index
    %0 = vector.load %arg1[%c0, %c0_0] : memref<8x32xf32, #tpu.memory_space<vmem>>, vector<8x32xf32>
    %c0_1 = arith.constant 0 : index
    %c0_2 = arith.constant 0 : index
    %1 = vector.load %arg2[%c0_1, %c0_2] : memref<1x32xf32, #tpu.memory_space<vmem>>, vector<1x32xf32>
    %2 = vector.broadcast %1 : vector<1x32xf32> to vector<8x32xf32>
    %3 = arith.mulf %0, %2 : vector<8x32xf32>
    %cst = arith.constant dense<0.000000e+00> : vector<8xf32>
    %4 = vector.multi_reduction <add>, %3, %cst [1] : vector<8x32xf32> to vector<8xf32>
    %5 = vector.shape_cast %4 : vector<8xf32> to vector<8x1xf32>
    %c0_3 = arith.constant 0 : index
    %6 = memref.load %arg3[%c0_3] : memref<1xf32, #tpu.memory_space<smem>>
    %7 = vector.broadcast %6 : f32 to vector<8x1xf32>
    %8 = arith.addf %5, %7 : vector<8x1xf32>
    %9 = arith.negf %8 : vector<8x1xf32>
    %10 = math.exp %9 : vector<8x1xf32>
    %cst_4 = arith.constant 1.000000e+00 : f32
    %11 = vector.broadcast %cst_4 : f32 to vector<8x1xf32>
    %12 = arith.addf %11, %10 : vector<8x1xf32>
    %13 = arith.divf %11, %12 : vector<8x1xf32>
    %c0_5 = arith.constant 0 : index
    %c0_6 = arith.constant 0 : index
    %14 = vector.load %arg4[%c0_5, %c0_6] : memref<8x1xf32, #tpu.memory_space<vmem>>, vector<8x1xf32>
    tpu.vector_store %arg4[%c0_5, %c0_6], %13 {strides = array<i32>} : memref<8x1xf32, #tpu.memory_space<vmem>>, vector<8x1xf32>,
    return
  }
  func.func @transform_0(%arg0: i32) -> (i32, i32) {
    %c0_i32 = arith.constant 0 : i32
    %c0_i32_0 = arith.constant 0 : i32
    return %arg0, %c0_i32 : i32, i32
  }
  func.func @transform_1(%arg0: i32) -> (i32, i32) {
    %c0_i32 = arith.constant 0 : i32
    %c0_i32_0 = arith.constant 0 : i32
    %c0_i32_1 = arith.constant 0 : i32
    return %c0_i32, %c0_i32_0 : i32, i32
  }
  func.func @transform_2(%arg0: i32) -> i32 {
    %c0_i32 = arith.constant 0 : i32
    %c0_i32_0 = arith.constant 0 : i32
    return %c0_i32 : i32
  }
  func.func @transform_3(%arg0: i32) -> (i32, i32) {
    %c0_i32 = arith.constant 0 : i32
    %c0_i32_0 = arith.constant 0 : i32
    return %arg0, %c0_i32 : i32, i32
  }
}

</mosaic_0001>

<llo_original>
// kernel: tpu_custom_call.1
$region0: #{tpu_custom_call.1}
  #allocation0 [shape = 'u32[]', space=smem, size = 0x4, offset = 0x4, fixed_abs, tag = 'smem constant byte address 0x4 - core index']
  #allocation1 [shape = 'u32[144,128]{1,0:T(1,128)}', space=vmem, size = 0x12000, scoped, tag = 'internal scratch']
  #allocation2 [shape = 'f32[1]{0:T(128)S(6)}', space=smem, size = 0x200, scoped, tag = 'scoped memory for tpu_custom_call.1']
  %s0 = inlined_call_operand.hbm [shape: f32[8,32], index: 0, kind: input, shape index: {}]
  %s1 = inlined_call_operand.vmem [shape: f32[1,32], index: 1, kind: input, shape index: {}]
  %s2 = inlined_call_operand.<no memory space> [shape: f32[1], index: 2, kind: input, shape index: {}]
  %s3 = inlined_call_operand.vmem [shape: f32[8,1], index: 3, kind: output, shape index: {}]
  %s4 = sld [smem:[#allocation0]]
  $region26: #{tpu_custom_call.1} parent=0
    _
  %s6 = ssub.s32 1, %s4
  %s7 = scalar_select 0, %s6, %s4
  %8 = sst [smem:[#allocation2]] %s2
  $region1: #{tpu_custom_call.1} parent=0
    #allocation3 [shape = 'u8[4096]{0}', space=vmem, size = 0x1000, scoped, tag = 'input window, operand 0, single buffered']
    #allocation4 [shape = 's32[1]{0}', space=sflag, size = 0x4, scoped, tag = 'scoped memory for tpu_custom_call.1']
    %9 = vsyncpa [#allocation4], 0
    // Predicated region
    $region2: #{tpu_custom_call.1} parent=1 // pred_check
      _
    $region3: #{tpu_custom_call.1} parent=1 // pred_check_branch
      %11 = sbr.rel (0) target = $region5
    $region4: #{tpu_custom_call.1} parent=1 // pred_region
      %s13 = ssub.s32 128, 128
      %14 = vsyncadd [#allocation4], %s13
      %s16 = sshll.u32 [#allocation3], 4
      %s17 = int_to_ptr.vmem [resolvable:$true] %s16
      %19 = dma.hbm_to_vmem [thread:$0]  %s0, 128, %s17, [#allocation4]
    $region5: #{tpu_custom_call.1} parent=1 // pred_fallthru
      _
    // Predicated region
    $region6: #{tpu_custom_call.1} parent=1 // pred_check
      _
    $region7: #{tpu_custom_call.1} parent=1 // pred_check_branch
      %21 = sbr.rel (0) target = $region9
    $region8: #{tpu_custom_call.1} parent=1 // pred_region
      _
    $region9: #{tpu_custom_call.1} parent=1 // pred_fallthru
      _
    // Predicated region
    $region10: #{tpu_custom_call.1} parent=1 // pred_check
      _
    $region11: #{tpu_custom_call.1} parent=1 // pred_check_branch
      %23 = sbr.rel (0) target = $region13
    $region12: #{tpu_custom_call.1} parent=1 // pred_region
      _
    $region13: #{tpu_custom_call.1} parent=1 // pred_fallthru
      _
    // Predicated region
    $region14: #{tpu_custom_call.1} parent=1 // pred_check
      _
    $region15: #{tpu_custom_call.1} parent=1 // pred_check_branch
      %25 = sbr.rel (0) target = $region17
    $region16: #{tpu_custom_call.1} parent=1 // pred_region
      %26 = dma.done [#allocation4], 128
    $region17: #{tpu_custom_call.1} parent=1 // pred_fallthru
      _
    %v27 = vld [vmem:[#allocation3] sm:$0xff]
    %v28 = vld [vmem:[%s1] sm:$0x1]
    %v30 = vlaneseq
    %v31 = vshrl.u32 %v30, 7
    %v32 = vsub.s32 0, %v31
    %v33 = vrot.slane %v28, %v32
    %v35 = vmul.f32 %v27, %v33
    %vm36 = vcmask 261120
    %v37 = vsel %vm36, %v35, 0.0
    %38 = vadd.xlane.f32.xlu0 %v37
    %v39 = vpop.xlane.xlu0 %38
    %s40 = sld [smem:[#allocation2]]
    %v41 = vstv %s40
    %v42 = vadd.f32 %v39, %v41
    %v43 = vxor.u32 %v42, 2147483648
    %v44 = vmul.f32 %v43, 1.442695
    %v45 = vpow.pop %v44
    %v46 = vadd.f32 %v45, 1.0
    %v47 = vrcp.pop %v46
    %v48 = vmul.f32 1.0, %v47
    %vm49 = vcmask 7168
    %50 = vst.msk [vmem:[%s3] sm:$0xff] %vm49, %v48
    // Predicated region
    $region18: #{tpu_custom_call.1} parent=1 // pred_check
      _
    $region19: #{tpu_custom_call.1} parent=1 // pred_check_branch
      %52 = sbr.rel (0) target = $region21
    $region20: #{tpu_custom_call.1} parent=1 // pred_region
      _
    $region21: #{tpu_custom_call.1} parent=1 // pred_fallthru
      _
    // Predicated region
    $region22: #{tpu_custom_call.1} parent=1 // pred_check
      _
    $region23: #{tpu_custom_call.1} parent=1 // pred_check_branch
      %54 = sbr.rel (0) target = $region25
    $region24: #{tpu_custom_call.1} parent=1 // pred_region
      _
    $region25: #{tpu_custom_call.1} parent=1 // pred_fallthru
      _
    %55 = vsyncpa [#allocation4], 1

</llo_original>
